<compile_context>
chip_gen: v7x
topology: tpu7x:2x2x1
jax: 0.10.0
libtpu: 0.0.40
codegen_flags: <defaults>
</compile_context>

<pallas_src>
import functools

import jax
import jax.numpy as jnp
from jax.experimental import pallas as pl
from jax.experimental.pallas import tpu as pltpu

_TILE_M = 512   # patch rows per grid step (fits easily in scoped VMEM on v7x)
_LANE = 128     # TPU lane width; output last dim padded to a multiple of this


def _round_up(x: int, m: int) -> int:
    return (x + m - 1) // m * m


# ----------------------------- Pallas kernel -------------------------------

def _patch_embed_kernel(x_ref, w_ref, b_ref, o_ref):
    # x_ref: (TM, K) bf16 patches; w_ref: (K, Dp) bf16 (resident);
    # b_ref: (1, Dp) f32 (resident); o_ref: (TM, Dp) f32.
    acc = jnp.dot(x_ref[...], w_ref[...], preferred_element_type=jnp.float32)
    o_ref[...] = (acc + b_ref[...]).astype(o_ref.dtype)


def patch_to_embedding_pallas(patches_2d: jax.Array,
                              weight_t: jax.Array,
                              bias_2d: jax.Array,
                              *,
                              out_dtype=jnp.float32) -> jax.Array:
    """patches_2d: (M, K); weight_t: (K, Dp); bias_2d: (1, Dp) -> (M, Dp)."""
    M, K = patches_2d.shape
    K2, Dp = weight_t.shape
    assert K == K2
    assert Dp % _LANE == 0, "embedding dim must be padded to a multiple of 128"

    # Full-extent block when M is small; otherwise stream TM-row tiles.
    tm = _TILE_M if M >= _TILE_M else M
    grid_m = pl.cdiv(M, tm)

    return pl.pallas_call(
        _patch_embed_kernel,
        out_shape=jax.ShapeDtypeStruct((M, Dp), out_dtype),
        grid=(grid_m,),
        in_specs=[
            pl.BlockSpec((tm, K), lambda i: (i, 0)),    # streamed patch rows
            pl.BlockSpec((K, Dp), lambda i: (0, 0)),    # VMEM-resident weight
            pl.BlockSpec((1, Dp), lambda i: (0, 0)),    # VMEM-resident bias
        ],
        out_specs=pl.BlockSpec((tm, Dp), lambda i: (i, 0)),
        compiler_params=pltpu.CompilerParams(
            dimension_semantics=("parallel",),          # megacore on v7x
            allow_input_fusion=[True, False, False],    # fuse patchify producer
        ),
    )(patches_2d, weight_t, bias_2d)


# ----------------------------- Module glue ---------------------------------

def patchify(image_batch: jax.Array, patch_size: int) -> jax.Array:
    """NCHW (B, C, H, W) -> (B, num_patches, C*patch*patch)."""
    B, C, H, W = image_batch.shape
    p = patch_size
    assert H % p == 0 and W % p == 0
    gh, gw = H // p, W // p
    x = image_batch.reshape(B, C, gh, p, gw, p)
    # -> (B, gh, gw, C, p, p): patches in row-major spatial order,
    # each patch flattened as (C, ph, pw).
    x = jnp.transpose(x, (0, 2, 4, 1, 3, 5))
    return x.reshape(B, gh * gw, C * p * p)


class SwinTransformerParams:
    def __init__(self, input_image_channels, patch_size,
                 initial_embedding_dim, window_size):
        self.input_image_channels = input_image_channels
        self.patch_size = patch_size
        self.initial_embedding_dim = initial_embedding_dim
        self.window_size = window_size


class SwinTransformer:
    """JAX/Pallas port of the (truncated) PyTorch SwinTransformer forward."""

    def __init__(self, params: SwinTransformerParams, key: jax.Array):
        self.params = params
        in_features = (params.patch_size * params.patch_size
                       * params.input_image_channels)
        out_features = params.initial_embedding_dim
        kw, kb = jax.random.split(key)
        # Deterministic init mimicking nn.Linear's uniform(-1/sqrt(fan_in), ...)
        bound = 1.0 / jnp.sqrt(jnp.float32(in_features))
        # PyTorch Linear weight is (out, in); store pre-transposed (in, out)
        # for the kernel's x @ W^T.
        self.weight_t = jax.random.uniform(
            kw, (in_features, out_features), jnp.float32, -bound, bound)
        self.bias = jax.random.uniform(
            kb, (out_features,), jnp.float32, -bound, bound)

        # Kernel-side parameters: embedding dim zero-padded to a lane multiple
        # (lane-dense stores); weight stored bf16 (MXU-friendly, half the
        # VMEM/HBM bytes), bias kept f32 for the f32 post-accumulation add.
        d_pad = _round_up(out_features, _LANE)
        self._d_pad = d_pad
        w_pad = jnp.pad(self.weight_t, ((0, 0), (0, d_pad - out_features)))
        self.weight_t_kernel = w_pad.astype(jnp.bfloat16)
        self.bias_kernel = jnp.pad(
            self.bias, (0, d_pad - out_features)).reshape(1, d_pad)

    @functools.partial(jax.jit, static_argnums=0)
    def forward(self, image_batch: jax.Array):
        p = self.params.patch_size
        d = self.params.initial_embedding_dim
        # bf16 inputs halve HBM traffic; accumulation stays f32 on the MXU.
        patch_batch = patchify(image_batch.astype(jnp.bfloat16), p)  # (B, N, K)
        B, N, K = patch_batch.shape
        flat = patch_batch.reshape(B * N, K)
        emb_padded = patch_to_embedding_pallas(
            flat, self.weight_t_kernel, self.bias_kernel)            # (M, Dp)
        patch_embeddings = emb_padded[:, :d].reshape(B, N, d)
        # TODO(synk): the reference forward is truncated after the embedding
        # (no further stages / return shown); return embeddings + empty list
        # matching the annotated tuple[Tensor, list[Tensor]] signature.
        return patch_embeddings, []


# ----------------------------- Reference check ------------------------------

def _ref_forward(model: SwinTransformer, image_batch: jax.Array):
    # Same bf16-input / f32-accumulation numerics as the kernel path.
    patches = patchify(image_batch.astype(jnp.bfloat16),
                       model.params.patch_size)
    return (jnp.dot(patches, model.weight_t.astype(jnp.bfloat16),
                    preferred_element_type=jnp.float32)
            + model.bias)


if __name__ == "__main__":
    params = SwinTransformerParams(
        input_image_channels=4,
        patch_size=4,
        initial_embedding_dim=32,
        window_size=4,
    )

    root = jax.random.PRNGKey(0)
    k_img, k_model = jax.random.split(root)

    # Small input consistent with the module: B=2, C=4, H=W=16 (NCHW).
    image_batch = jax.random.normal(k_img, (2, 4, 16, 16), jnp.float32)

    model = SwinTransformer(params, k_model)
    embeddings, _ = model.forward(image_batch)
    embeddings = jax.block_until_ready(embeddings)

    ref = _ref_forward(model, image_batch)
    assert embeddings.shape == (2, 16, 32), embeddings.shape
    assert jnp.allclose(embeddings, ref, atol=2e-3, rtol=2e-3)

    print("KERNEL_OK")
</pallas_src>

<mosaic_0001>
module attributes {stable_mosaic.version = 11 : i64} {
  func.func @_patch_embed_kernel(%arg0: i32, %arg1: memref<32x64xbf16, #tpu.memory_space<vmem>>, %arg2: memref<64x128xbf16, #tpu.memory_space<vmem>>, %arg3: memref<1x128xf32, #tpu.memory_space<vmem>>, %arg4: memref<32x128xf32, #tpu.memory_space<vmem>>) attributes {dimension_semantics = [#tpu.dimension_semantics<parallel>], iteration_bounds = array<i64: 1>, scalar_prefetch = 0 : i64, scratch_operands = 0 : i64, tpu.core_type = #tpu.core_type<tc>, window_params = [{transform_indices = @transform_0, window_bounds = array<i64: 32, 64>}, {pipeline_mode = #tpu.pipeline_mode<synchronous>, transform_indices = @transform_1, window_bounds = array<i64: 64, 128>}, {pipeline_mode = #tpu.pipeline_mode<synchronous>, transform_indices = @transform_2, window_bounds = array<i64: 1, 128>}, {transform_indices = @transform_3, window_bounds = array<i64: 32, 128>}]} {
    %c0 = arith.constant 0 : index
    %c0_0 = arith.constant 0 : index
    %0 = vector.load %arg1[%c0, %c0_0] : memref<32x64xbf16, #tpu.memory_space<vmem>>, vector<32x64xbf16>
    %c0_1 = arith.constant 0 : index
    %c0_2 = arith.constant 0 : index
    %1 = vector.load %arg2[%c0_1, %c0_2] : memref<64x128xbf16, #tpu.memory_space<vmem>>, vector<64x128xbf16>
    %cst = arith.constant dense<0.000000e+00> : vector<32x128xf32>
    %2 = tpu.matmul %0, %1, %cst {dimension_numbers = #tpu.dot_dimension_numbers<[1], [0], [0], [1], [0, 0, 1, 1], [], []>} : vector<32x64xbf16>, vector<64x128xbf16>, vector<32x128xf32> -> vector<32x128xf32>
    %c0_3 = arith.constant 0 : index
    %c0_4 = arith.constant 0 : index
    %3 = vector.load %arg3[%c0_3, %c0_4] : memref<1x128xf32, #tpu.memory_space<vmem>>, vector<1x128xf32>
    %4 = vector.broadcast %3 : vector<1x128xf32> to vector<32x128xf32>
    %5 = arith.addf %2, %4 : vector<32x128xf32>
    %c0_5 = arith.constant 0 : index
    %c0_6 = arith.constant 0 : index
    %6 = vector.load %arg4[%c0_5, %c0_6] : memref<32x128xf32, #tpu.memory_space<vmem>>, vector<32x128xf32>
    tpu.vector_store %arg4[%c0_5, %c0_6], %5 {strides = array<i32>} : memref<32x128xf32, #tpu.memory_space<vmem>>, vector<32x128xf32>,
    return
  }
  func.func @transform_0(%arg0: i32) -> (i32, i32) {
    %c0_i32 = arith.constant 0 : i32
    %c0_i32_0 = arith.constant 0 : i32
    return %arg0, %c0_i32 : i32, i32
  }
  func.func @transform_1(%arg0: i32) -> (i32, i32) {
    %c0_i32 = arith.constant 0 : i32
    %c0_i32_0 = arith.constant 0 : i32
    %c0_i32_1 = arith.constant 0 : i32
    return %c0_i32, %c0_i32_0 : i32, i32
  }
  func.func @transform_2(%arg0: i32) -> (i32, i32) {
    %c0_i32 = arith.constant 0 : i32
    %c0_i32_0 = arith.constant 0 : i32
    %c0_i32_1 = arith.constant 0 : i32
    return %c0_i32, %c0_i32_0 : i32, i32
  }
  func.func @transform_3(%arg0: i32) -> (i32, i32) {
    %c0_i32 = arith.constant 0 : i32
    %c0_i32_0 = arith.constant 0 : i32
    return %arg0, %c0_i32 : i32, i32
  }
}

</mosaic_0001>

<llo_original>
// kernel: forward.1
$region0: #{forward.1}
  #allocation0 [shape = 'u32[]', space=smem, size = 0x4, offset = 0x4, fixed_abs, tag = 'smem constant byte address 0x4 - core index']
  #allocation1 [shape = 'u32[144,128]{1,0:T(1,128)}', space=vmem, size = 0x12000, scoped, tag = 'internal scratch']
  %s0 = inlined_call_operand.vmem [shape: bf16[32,64], index: 0, kind: input, shape index: {}]
  %s1 = inlined_call_operand.vmem [shape: bf16[64,128], index: 1, kind: input, shape index: {}]
  %s2 = inlined_call_operand.vmem [shape: f32[1,128], index: 2, kind: input, shape index: {}]
  %s3 = inlined_call_operand.hbm [shape: f32[32,128], index: 3, kind: output, shape index: {}]
  %s4 = sld [smem:[#allocation0]]
  $region22: #{forward.1} parent=0
    _
  %s6 = ssub.s32 1, %s4
  %s7 = scalar_select 0, %s6, %s4
  $region1: #{forward.1} parent=0
    #allocation2 [shape = 'u8[16384]{0}', space=vmem, size = 0x4000, scoped, tag = 'output window, operand 0, single buffered']
    #allocation3 [shape = 's32[1]{0}', space=sflag, size = 0x4, scoped, tag = 'scoped memory for forward.1']
    %8 = vsyncpa [#allocation3], 0
    // Predicated region
    $region2: #{forward.1} parent=1 // pred_check
      _
    $region3: #{forward.1} parent=1 // pred_check_branch
      %10 = sbr.rel (0) target = $region5
    $region4: #{forward.1} parent=1 // pred_region
      _
    $region5: #{forward.1} parent=1 // pred_fallthru
      _
    // Predicated region
    $region6: #{forward.1} parent=1 // pred_check
      _
    $region7: #{forward.1} parent=1 // pred_check_branch
      %12 = sbr.rel (0) target = $region9
    $region8: #{forward.1} parent=1 // pred_region
      _
    $region9: #{forward.1} parent=1 // pred_fallthru
      _
    // Predicated region
    $region10: #{forward.1} parent=1 // pred_check
      _
    $region11: #{forward.1} parent=1 // pred_check_branch
      %14 = sbr.rel (0) target = $region13
    $region12: #{forward.1} parent=1 // pred_region
      _
    $region13: #{forward.1} parent=1 // pred_fallthru
      _
    %v16 = vld [vmem:[%s0] sm:$0xf]
    %v17 = vld [vmem:[%s0 + $0x4] sm:$0xf]
    %v18 = vld [vmem:[%s0 + $0x8] sm:$0xf]
    %v19 = vld [vmem:[%s0 + $0xc] sm:$0xf]
    %v20 = vld [vmem:[%s1] sm:$0xf]
    %v21 = vld [vmem:[%s1 + $0x4] sm:$0xf]
    %v22 = vld [vmem:[%s1 + $0x8] sm:$0xf]
    %v23 = vld [vmem:[%s1 + $0xc] sm:$0xf]
    %v24 = vld [vmem:[%s1 + $0x10] sm:$0xf]
    %v25 = vld [vmem:[%s1 + $0x14] sm:$0xf]
    %v26 = vld [vmem:[%s1 + $0x18] sm:$0xf]
    %v27 = vld [vmem:[%s1 + $0x1c] sm:$0xf]
    %v28 = vld [vmem:[%s2] sm:$0x1]
    %v30 = vlaneseq
    %v31 = vshrl.u32 %v30, 7
    %v32 = vsub.s32 0, %v31
    %v33 = vrot.slane %v28, %v32
    %v39 = vunpack.c.l.b16 %v16
    %v40 = vunpack.c.l.b16 %v17
    %v41 = vunpack.c.l.b16 %v18
    %v42 = vunpack.c.l.b16 %v19
    %v43 = vpack.c.b16 %v40, %v39
    %v44 = vpack.c.b16 %v42, %v41
    %v53 = vunpack.c.l.b16 %v20
    %v54 = vunpack.c.l.b16 %v21
    %v55 = vunpack.c.l.b16 %v22
    %v56 = vunpack.c.l.b16 %v23
    %v57 = vunpack.c.l.b16 %v24
    %v58 = vunpack.c.l.b16 %v25
    %v59 = vunpack.c.l.b16 %v26
    %v60 = vunpack.c.l.b16 %v27
    %v61 = vpack.c.b16 %v54, %v53
    %v62 = vpack.c.b16 %v56, %v55
    %v63 = vpack.c.b16 %v58, %v57
    %v64 = vpack.c.b16 %v60, %v59
    %vm69 = vcmask 523264
    %v71 = vsel %vm69, %v43, 0
    %v74 = vsel %vm69, %v44, 0
    %76 = vmatprep.subr.bf16.mxu0 0
    %77 = vmatpush1.bf16.msra.mxu0 %v61
    %78 = vmatprep.subr.bf16.mxu0 0
    %79 = vmatpush1.bf16.msra.mxu0 %v62
    %80 = vmatprep.subr.bf16.mxu0 0
    %81 = vmatpush1.bf16.msra.mxu0 %v63
    %82 = vmatprep.subr.bf16.mxu0 0
    %83 = vmatpush1.bf16.msra.mxu0 %v64
    %84 = vmatprep.subr.bf16.mxu0 0
    %85 = vmatpush1.bf16.msra.mxu0 0
    %86 = vmatprep.subr.bf16.mxu0 0
    %87 = vmatpush1.bf16.msra.mxu0 0
    %88 = vmatprep.subr.bf16.mxu0 0
    %89 = vmatpush1.bf16.msra.mxu0 0
    %90 = vmatprep.subr.bf16.mxu0 0
    %91 = vmatpush1.bf16.msra.mxu0 0
    %92 = vmatprep.subr.bf16.mxu0 0
    %93 = vmatpush1.bf16.msra.mxu0 0
    %94 = vmatprep.subr.bf16.mxu0 0
    %95 = vmatpush1.bf16.msra.mxu0 0
    %96 = vmatprep.subr.bf16.mxu0 0
    %97 = vmatpush1.bf16.msra.mxu0 0
    %98 = vmatprep.subr.bf16.mxu0 0
    %99 = vmatpush1.bf16.msra.mxu0 0
    %100 = vmatprep.subr.bf16.mxu0 0
    %101 = vmatpush1.bf16.msra.mxu0 0
    %102 = vmatprep.subr.bf16.mxu0 0
    %103 = vmatpush1.bf16.msra.mxu0 0
    %104 = vmatprep.subr.bf16.mxu0 0
    %105 = vmatpush1.bf16.msra.mxu0 0
    %106 = vmatprep.subr.bf16.mxu0 0
    %107 = vmatpush1.bf16.msra.mxu0 0
    %108 = vmatprep.mubr.bf16.mxu0 0
    %109 = vmatmul.mubr.bf16.gmra.mrb[0].mxu0 %v71
    %v110 = vpop.f32.mrb[0].mxu0
    %v111 = vadd.f32 %v33, %v110
    %v112 = vpop.f32.mrb[0].mxu0
    %v113 = vpop.f32.mrb[0].mxu0
    %v114 = vadd.f32 %v33, %v113
    %v115 = vpop.f32.mrb[0].mxu0
    %116 = vmatprep.mubr.bf16.mxu0 0
    %117 = vmatmul.mubr.bf16.gmra.mrb[0].mxu0 %v74
    %v118 = vpop.f32.mrb[0].mxu0
    %v119 = vadd.f32 %v33, %v118
    %v120 = vpop.f32.mrb[0].mxu0
    %v121 = vpop.f32.mrb[0].mxu0
    %v122 = vadd.f32 %v33, %v121
    %v123 = vpop.f32.mrb[0].mxu0
    %124 = vdwg.mxu0
    %125 = vst [vmem:[#allocation2] sm:$0xff] %v111
    %126 = vst [vmem:[#allocation2 + $0x8] sm:$0xff] %v114
    %127 = vst [vmem:[#allocation2 + $0x10] sm:$0xff] %v119
    %128 = vst [vmem:[#allocation2 + $0x18] sm:$0xff] %v122
    // Predicated region
    $region14: #{forward.1} parent=1 // pred_check
      _
    $region15: #{forward.1} parent=1 // pred_check_branch
      %130 = sbr.rel (0) target = $region17
    $region16: #{forward.1} parent=1 // pred_region
      %s132 = ssub.s32 512, 512
      %133 = vsyncadd [#allocation3], %s132
      %s134 = sshll.u32 [#allocation2], 4
      %s135 = int_to_ptr.vmem [resolvable:$true] %s134
      %140 = dma.vmem_to_hbm [thread:$0]  %s135, 512, %s3, [#allocation3], 128, 128, 8
    $region17: #{forward.1} parent=1 // pred_fallthru
      _
    // Predicated region
    $region18: #{forward.1} parent=1 // pred_check
      _
    $region19: #{forward.1} parent=1 // pred_check_branch
      %142 = sbr.rel (0) target = $region21
    $region20: #{forward.1} parent=1 // pred_region
      %143 = dma.done [#allocation3], 512
    $region21: #{forward.1} parent=1 // pred_fallthru
      _
    %144 = vsyncpa [#allocation3], 1

</llo_original>
